<compile_context>
chip_gen: v5e
topology: v5e:2x2
jax: 0.10.0
libtpu: 0.0.40
codegen_flags: <defaults>
</compile_context>

<pallas_src>
import numpy as np
import jax
import jax.numpy as jnp
from jax import lax
from jax.experimental import pallas as pl
from jax.experimental.pallas import tpu as pltpu

SLEN = 12          # seasonal period (matches module default)
SUB = 8            # sublanes per batch tile
LANES = 256        # lanes per batch tile (2 vregs -> 2 independent chains)
B_TILE = SUB * LANES


def _holt_winters_kernel(params_ref, season_ref, series_ref, out_ref):
    """Sequential Holt-Winters recurrence (rv=False path) for one batch tile.

    params_ref : SMEM (2,)                float32  -> [sigmoid(alpha), sigmoid(gamma)]
    season_ref : VMEM (SLEN, SUB, LANES)  float32  -> pre-rolled seasonal profile
    series_ref : VMEM (T, SUB, LANES)     float32
    out_ref    : VMEM (n_preds, SUB, LANES) float32
    """
    T = series_ref.shape[0]
    n_preds = out_ref.shape[0]

    sa = params_ref[0]
    sg = params_ref[1]
    one_m_sa = 1.0 - sa          # hoisted loop invariants
    one_m_sg = 1.0 - sg

    # Seasonal state: SLEN vregs pulled from the pre-rolled table.
    seasonals = [season_ref[s] for s in range(SLEN)]

    # i == 0: smooth initialised to the first observation.
    smooth = series_ref[0]

    def step(v, k, smooth, seasonals):
        new_smooth = sa * (v - seasonals[k]) + one_m_sa * smooth
        seasonals[k] = sg * (v - new_smooth) + one_m_sg * seasonals[k]
        return new_smooth

    # ---- prefix: i = 1 .. min(T, SLEN) - 1 (static unroll) -----------------
    for i in range(1, min(T, SLEN)):
        smooth = step(series_ref[i], i % SLEN, smooth, seasonals)

    # ---- full seasonal periods + remainder (only if T > SLEN) --------------
    if T > SLEN:
        n_full = T // SLEN - 1                 # full periods starting at i = SLEN
        rem_start = SLEN * (T // SLEN)         # first index of the static tail

        if n_full > 0:
            def period_body(p, carry):
                sm, seas_t = carry
                seas = list(seas_t)
                base = (p + 1) * SLEN          # i = base + k, so i % SLEN == k
                for k in range(SLEN):
                    v = series_ref[base + k]
                    sm = step(v, k, sm, seas)
                return sm, tuple(seas)

            smooth, seas_t = lax.fori_loop(
                0, n_full, period_body, (smooth, tuple(seasonals)))
            seasonals = list(seas_t)

        for i in range(rem_start, T):          # static remainder
            smooth = step(series_ref[i], i % SLEN, smooth, seasonals)

    # ---- forecasts: i = T .. T + n_preds - 1 (last n_preds of torch result) -
    for j in range(n_preds):
        out_ref[j] = smooth + seasonals[(T + j) % SLEN]


def holt_winters_no_trend(series, series_shifts, alpha, gamma, init_season,
                          n_preds=12):
    """JAX wrapper reproducing holt_winters_no_trend.forward(..., rv=False).

    series        : (B, T) float
    series_shifts : (B,)   integer
    returns       : (B, n_preds) float32
    """
    series = jnp.asarray(series, jnp.float32)
    B, T = series.shape
    shifts = jnp.asarray(series_shifts, jnp.int32)
    init_season = jnp.asarray(init_season, jnp.float32)

    # sigmoid(alpha), sigmoid(gamma) computed once on the host side of the call.
    params = jnp.stack([jax.nn.sigmoid(jnp.asarray(alpha, jnp.float32)),
                        jax.nn.sigmoid(jnp.asarray(gamma, jnp.float32))])  # (2,)

    # torch.roll(init_season, shift_b): rolled[b, s] = init_season[(s - shift_b) % SLEN]
    s_idx = jnp.mod(jnp.arange(SLEN, dtype=jnp.int32)[None, :] - shifts[:, None],
                    SLEN)                                    # (B, SLEN)
    season0 = init_season[s_idx]                             # (B, SLEN)

    # Pad batch to a multiple of B_TILE and pack as (tiles, SUB, LANES).
    num_tiles = -(-B // B_TILE)
    B_pad = num_tiles * B_TILE
    pad = B_pad - B
    series_p = jnp.pad(series, ((0, pad), (0, 0)))           # (B_pad, T)
    season_p = jnp.pad(season0, ((0, pad), (0, 0)))          # (B_pad, SLEN)

    # (tiles, T, SUB, LANES) / (tiles, SLEN, SUB, LANES): time on the leading
    # (per-step) axis, batch dense on sublanes x lanes.
    series_tiled = series_p.reshape(num_tiles, SUB, LANES, T).transpose(0, 3, 1, 2)
    season_tiled = season_p.reshape(num_tiles, SUB, LANES, SLEN).transpose(0, 3, 1, 2)

    out_tiled = pl.pallas_call(
        _holt_winters_kernel,
        out_shape=jax.ShapeDtypeStruct((num_tiles, n_preds, SUB, LANES),
                                       jnp.float32),
        grid=(num_tiles,),
        in_specs=[
            pl.BlockSpec(memory_space=pltpu.MemorySpace.SMEM),                 # params
            pl.BlockSpec((None, SLEN, SUB, LANES), lambda b: (b, 0, 0, 0)),    # seasonal
            pl.BlockSpec((None, T, SUB, LANES), lambda b: (b, 0, 0, 0)),       # series
        ],
        out_specs=pl.BlockSpec((None, n_preds, SUB, LANES),
                               lambda b: (b, 0, 0, 0)),
        compiler_params=pltpu.CompilerParams(
            dimension_semantics=("parallel",)),
    )(params, season_tiled, series_tiled)

    # (tiles, n_preds, SUB, LANES) -> (B_pad, n_preds) -> (B, n_preds)
    out = out_tiled.transpose(0, 2, 3, 1).reshape(B_pad, n_preds)
    return out[:B]


def _reference_numpy(series, shifts, alpha, gamma, init_season, n_preds=12,
                     slen=SLEN):
    """Pure-numpy re-implementation of the PyTorch forward (rv=False)."""
    series = np.asarray(series, np.float32)
    B, T = series.shape
    sa = 1.0 / (1.0 + np.exp(-np.float32(alpha)))
    sg = 1.0 / (1.0 + np.exp(-np.float32(gamma)))
    seasonals = np.stack(
        [np.roll(np.asarray(init_season, np.float32), int(r))
         for r in np.asarray(shifts)])                       # (B, slen)
    result = []
    smooth = None
    for i in range(T + n_preds):
        if i == 0:
            smooth = series[:, 0].copy()
            result.append(series[:, 0])
            continue
        if i < T:
            val = series[:, i]
            smooth = sa * (val - seasonals[:, i % slen]) + (1.0 - sa) * smooth
            seasonals[:, i % slen] = (sg * (val - smooth)
                                      + (1.0 - sg) * seasonals[:, i % slen])
            result.append(smooth + seasonals[:, i % slen])
        else:
            result.append(smooth + seasonals[:, i % slen])
    return np.stack(result, axis=1)[:, -n_preds:]


if __name__ == "__main__":
    key = jax.random.PRNGKey(0)
    k_series, k_shift, k_season, k2_series, k2_shift = jax.random.split(key, 5)

    alpha, gamma = 0.1, 0.1
    init_season = jax.random.uniform(k_season, (SLEN,), dtype=jnp.float32)

    # --- primary small demo shape: T < SLEN (prefix-only path) --------------
    B, T, N_PREDS = 4, 8, 12
    series = jax.random.normal(k_series, (B, T), dtype=jnp.float32)
    series_shifts = jax.random.randint(k_shift, (B,), 0, SLEN, dtype=jnp.int32)

    out = holt_winters_no_trend(series, series_shifts, alpha, gamma,
                                init_season, n_preds=N_PREDS)
    out = jax.block_until_ready(out)
    ref = _reference_numpy(np.asarray(series), np.asarray(series_shifts),
                           alpha, gamma, np.asarray(init_season),
                           n_preds=N_PREDS)
    assert out.shape == (B, N_PREDS), out.shape
    np.testing.assert_allclose(np.asarray(out), ref, rtol=1e-5, atol=1e-5)

    # --- second check: T > SLEN exercises the fori_loop period path ---------
    B2, T2 = 3, 30
    series2 = jax.random.normal(k2_series, (B2, T2), dtype=jnp.float32)
    shifts2 = jax.random.randint(k2_shift, (B2,), 0, SLEN, dtype=jnp.int32)
    out2 = jax.block_until_ready(
        holt_winters_no_trend(series2, shifts2, alpha, gamma, init_season,
                              n_preds=N_PREDS))
    ref2 = _reference_numpy(np.asarray(series2), np.asarray(shifts2),
                            alpha, gamma, np.asarray(init_season),
                            n_preds=N_PREDS)
    np.testing.assert_allclose(np.asarray(out2), ref2, rtol=1e-5, atol=1e-5)

    print("KERNEL_OK")
</pallas_src>

<mosaic_0001>
module attributes {stable_mosaic.version = 11 : i64} {
  func.func @_holt_winters_kernel(%arg0: i32, %arg1: memref<2xf32, #tpu.memory_space<smem>>, %arg2: memref<1x12x8x256xf32, #tpu.memory_space<vmem>>, %arg3: memref<1x8x8x256xf32, #tpu.memory_space<vmem>>, %arg4: memref<1x12x8x256xf32, #tpu.memory_space<vmem>>) attributes {dimension_semantics = [#tpu.dimension_semantics<parallel>], iteration_bounds = array<i64: 1>, scalar_prefetch = 0 : i64, scratch_operands = 0 : i64, tpu.core_type = #tpu.core_type<tc>, window_params = [{transform_indices = @transform_0, window_bounds = array<i64: 2>}, {transform_indices = @transform_1, window_bounds = array<i64: 1, 12, 8, 256>}, {transform_indices = @transform_2, window_bounds = array<i64: 1, 8, 8, 256>}, {transform_indices = @transform_3, window_bounds = array<i64: 1, 12, 8, 256>}]} {
    %c0 = arith.constant 0 : index
    %0 = memref.load %arg1[%c0] : memref<2xf32, #tpu.memory_space<smem>>
    %c1 = arith.constant 1 : index
    %1 = memref.load %arg1[%c1] : memref<2xf32, #tpu.memory_space<smem>>
    %cst = arith.constant 1.000000e+00 : f32
    %2 = arith.subf %cst, %0 : f32
    %cst_0 = arith.constant 1.000000e+00 : f32
    %3 = arith.subf %cst_0, %1 : f32
    %c0_1 = arith.constant 0 : index
    %c0_2 = arith.constant 0 : index
    %c0_3 = arith.constant 0 : index
    %c0_4 = arith.constant 0 : index
    %4 = vector.load %arg2[%c0_1, %c0_2, %c0_3, %c0_4] : memref<1x12x8x256xf32, #tpu.memory_space<vmem>>, vector<1x1x8x256xf32>
    %5 = vector.shape_cast %4 : vector<1x1x8x256xf32> to vector<8x256xf32>
    %c0_5 = arith.constant 0 : index
    %c1_6 = arith.constant 1 : index
    %c0_7 = arith.constant 0 : index
    %c0_8 = arith.constant 0 : index
    %6 = vector.load %arg2[%c0_5, %c1_6, %c0_7, %c0_8] : memref<1x12x8x256xf32, #tpu.memory_space<vmem>>, vector<1x1x8x256xf32>
    %7 = vector.shape_cast %6 : vector<1x1x8x256xf32> to vector<8x256xf32>
    %c0_9 = arith.constant 0 : index
    %c2 = arith.constant 2 : index
    %c0_10 = arith.constant 0 : index
    %c0_11 = arith.constant 0 : index
    %8 = vector.load %arg2[%c0_9, %c2, %c0_10, %c0_11] : memref<1x12x8x256xf32, #tpu.memory_space<vmem>>, vector<1x1x8x256xf32>
    %9 = vector.shape_cast %8 : vector<1x1x8x256xf32> to vector<8x256xf32>
    %c0_12 = arith.constant 0 : index
    %c3 = arith.constant 3 : index
    %c0_13 = arith.constant 0 : index
    %c0_14 = arith.constant 0 : index
    %10 = vector.load %arg2[%c0_12, %c3, %c0_13, %c0_14] : memref<1x12x8x256xf32, #tpu.memory_space<vmem>>, vector<1x1x8x256xf32>
    %11 = vector.shape_cast %10 : vector<1x1x8x256xf32> to vector<8x256xf32>
    %c0_15 = arith.constant 0 : index
    %c4 = arith.constant 4 : index
    %c0_16 = arith.constant 0 : index
    %c0_17 = arith.constant 0 : index
    %12 = vector.load %arg2[%c0_15, %c4, %c0_16, %c0_17] : memref<1x12x8x256xf32, #tpu.memory_space<vmem>>, vector<1x1x8x256xf32>
    %13 = vector.shape_cast %12 : vector<1x1x8x256xf32> to vector<8x256xf32>
    %c0_18 = arith.constant 0 : index
    %c5 = arith.constant 5 : index
    %c0_19 = arith.constant 0 : index
    %c0_20 = arith.constant 0 : index
    %14 = vector.load %arg2[%c0_18, %c5, %c0_19, %c0_20] : memref<1x12x8x256xf32, #tpu.memory_space<vmem>>, vector<1x1x8x256xf32>
    %15 = vector.shape_cast %14 : vector<1x1x8x256xf32> to vector<8x256xf32>
    %c0_21 = arith.constant 0 : index
    %c6 = arith.constant 6 : index
    %c0_22 = arith.constant 0 : index
    %c0_23 = arith.constant 0 : index
    %16 = vector.load %arg2[%c0_21, %c6, %c0_22, %c0_23] : memref<1x12x8x256xf32, #tpu.memory_space<vmem>>, vector<1x1x8x256xf32>
    %17 = vector.shape_cast %16 : vector<1x1x8x256xf32> to vector<8x256xf32>
    %c0_24 = arith.constant 0 : index
    %c7 = arith.constant 7 : index
    %c0_25 = arith.constant 0 : index
    %c0_26 = arith.constant 0 : index
    %18 = vector.load %arg2[%c0_24, %c7, %c0_25, %c0_26] : memref<1x12x8x256xf32, #tpu.memory_space<vmem>>, vector<1x1x8x256xf32>
    %19 = vector.shape_cast %18 : vector<1x1x8x256xf32> to vector<8x256xf32>
    %c0_27 = arith.constant 0 : index
    %c8 = arith.constant 8 : index
    %c0_28 = arith.constant 0 : index
    %c0_29 = arith.constant 0 : index
    %20 = vector.load %arg2[%c0_27, %c8, %c0_28, %c0_29] : memref<1x12x8x256xf32, #tpu.memory_space<vmem>>, vector<1x1x8x256xf32>
    %21 = vector.shape_cast %20 : vector<1x1x8x256xf32> to vector<8x256xf32>
    %c0_30 = arith.constant 0 : index
    %c9 = arith.constant 9 : index
    %c0_31 = arith.constant 0 : index
    %c0_32 = arith.constant 0 : index
    %22 = vector.load %arg2[%c0_30, %c9, %c0_31, %c0_32] : memref<1x12x8x256xf32, #tpu.memory_space<vmem>>, vector<1x1x8x256xf32>
    %23 = vector.shape_cast %22 : vector<1x1x8x256xf32> to vector<8x256xf32>
    %c0_33 = arith.constant 0 : index
    %c10 = arith.constant 10 : index
    %c0_34 = arith.constant 0 : index
    %c0_35 = arith.constant 0 : index
    %24 = vector.load %arg2[%c0_33, %c10, %c0_34, %c0_35] : memref<1x12x8x256xf32, #tpu.memory_space<vmem>>, vector<1x1x8x256xf32>
    %25 = vector.shape_cast %24 : vector<1x1x8x256xf32> to vector<8x256xf32>
    %c0_36 = arith.constant 0 : index
    %c11 = arith.constant 11 : index
    %c0_37 = arith.constant 0 : index
    %c0_38 = arith.constant 0 : index
    %26 = vector.load %arg2[%c0_36, %c11, %c0_37, %c0_38] : memref<1x12x8x256xf32, #tpu.memory_space<vmem>>, vector<1x1x8x256xf32>
    %27 = vector.shape_cast %26 : vector<1x1x8x256xf32> to vector<8x256xf32>
    %c0_39 = arith.constant 0 : index
    %c0_40 = arith.constant 0 : index
    %c0_41 = arith.constant 0 : index
    %c0_42 = arith.constant 0 : index
    %28 = vector.load %arg3[%c0_39, %c0_40, %c0_41, %c0_42] : memref<1x8x8x256xf32, #tpu.memory_space<vmem>>, vector<1x1x8x256xf32>
    %29 = vector.shape_cast %28 : vector<1x1x8x256xf32> to vector<8x256xf32>
    %c0_43 = arith.constant 0 : index
    %c1_44 = arith.constant 1 : index
    %c0_45 = arith.constant 0 : index
    %c0_46 = arith.constant 0 : index
    %30 = vector.load %arg3[%c0_43, %c1_44, %c0_45, %c0_46] : memref<1x8x8x256xf32, #tpu.memory_space<vmem>>, vector<1x1x8x256xf32>
    %31 = vector.shape_cast %30 : vector<1x1x8x256xf32> to vector<8x256xf32>
    %32 = arith.subf %31, %7 : vector<8x256xf32>
    %33 = vector.broadcast %0 : f32 to vector<8x256xf32>
    %34 = arith.mulf %33, %32 : vector<8x256xf32>
    %35 = vector.broadcast %2 : f32 to vector<8x256xf32>
    %36 = arith.mulf %35, %29 : vector<8x256xf32>
    %37 = arith.addf %34, %36 : vector<8x256xf32>
    %38 = arith.subf %31, %37 : vector<8x256xf32>
    %39 = vector.broadcast %1 : f32 to vector<8x256xf32>
    %40 = arith.mulf %39, %38 : vector<8x256xf32>
    %41 = vector.broadcast %3 : f32 to vector<8x256xf32>
    %42 = arith.mulf %41, %7 : vector<8x256xf32>
    %43 = arith.addf %40, %42 : vector<8x256xf32>
    %c0_47 = arith.constant 0 : index
    %c2_48 = arith.constant 2 : index
    %c0_49 = arith.constant 0 : index
    %c0_50 = arith.constant 0 : index
    %44 = vector.load %arg3[%c0_47, %c2_48, %c0_49, %c0_50] : memref<1x8x8x256xf32, #tpu.memory_space<vmem>>, vector<1x1x8x256xf32>
    %45 = vector.shape_cast %44 : vector<1x1x8x256xf32> to vector<8x256xf32>
    %46 = arith.subf %45, %9 : vector<8x256xf32>
    %47 = vector.broadcast %0 : f32 to vector<8x256xf32>
    %48 = arith.mulf %47, %46 : vector<8x256xf32>
    %49 = vector.broadcast %2 : f32 to vector<8x256xf32>
    %50 = arith.mulf %49, %37 : vector<8x256xf32>
    %51 = arith.addf %48, %50 : vector<8x256xf32>
    %52 = arith.subf %45, %51 : vector<8x256xf32>
    %53 = vector.broadcast %1 : f32 to vector<8x256xf32>
    %54 = arith.mulf %53, %52 : vector<8x256xf32>
    %55 = vector.broadcast %3 : f32 to vector<8x256xf32>
    %56 = arith.mulf %55, %9 : vector<8x256xf32>
    %57 = arith.addf %54, %56 : vector<8x256xf32>
    %c0_51 = arith.constant 0 : index
    %c3_52 = arith.constant 3 : index
    %c0_53 = arith.constant 0 : index
    %c0_54 = arith.constant 0 : index
    %58 = vector.load %arg3[%c0_51, %c3_52, %c0_53, %c0_54] : memref<1x8x8x256xf32, #tpu.memory_space<vmem>>, vector<1x1x8x256xf32>
    %59 = vector.shape_cast %58 : vector<1x1x8x256xf32> to vector<8x256xf32>
    %60 = arith.subf %59, %11 : vector<8x256xf32>
    %61 = vector.broadcast %0 : f32 to vector<8x256xf32>
    %62 = arith.mulf %61, %60 : vector<8x256xf32>
    %63 = vector.broadcast %2 : f32 to vector<8x256xf32>
    %64 = arith.mulf %63, %51 : vector<8x256xf32>
    %65 = arith.addf %62, %64 : vector<8x256xf32>
    %66 = arith.subf %59, %65 : vector<8x256xf32>
    %67 = vector.broadcast %1 : f32 to vector<8x256xf32>
    %68 = arith.mulf %67, %66 : vector<8x256xf32>
    %69 = vector.broadcast %3 : f32 to vector<8x256xf32>
    %70 = arith.mulf %69, %11 : vector<8x256xf32>
    %71 = arith.addf %68, %70 : vector<8x256xf32>
    %c0_55 = arith.constant 0 : index
    %c4_56 = arith.constant 4 : index
    %c0_57 = arith.constant 0 : index
    %c0_58 = arith.constant 0 : index
    %72 = vector.load %arg3[%c0_55, %c4_56, %c0_57, %c0_58] : memref<1x8x8x256xf32, #tpu.memory_space<vmem>>, vector<1x1x8x256xf32>
    %73 = vector.shape_cast %72 : vector<1x1x8x256xf32> to vector<8x256xf32>
    %74 = arith.subf %73, %13 : vector<8x256xf32>
    %75 = vector.broadcast %0 : f32 to vector<8x256xf32>
    %76 = arith.mulf %75, %74 : vector<8x256xf32>
    %77 = vector.broadcast %2 : f32 to vector<8x256xf32>
    %78 = arith.mulf %77, %65 : vector<8x256xf32>
    %79 = arith.addf %76, %78 : vector<8x256xf32>
    %80 = arith.subf %73, %79 : vector<8x256xf32>
    %81 = vector.broadcast %1 : f32 to vector<8x256xf32>
    %82 = arith.mulf %81, %80 : vector<8x256xf32>
    %83 = vector.broadcast %3 : f32 to vector<8x256xf32>
    %84 = arith.mulf %83, %13 : vector<8x256xf32>
    %85 = arith.addf %82, %84 : vector<8x256xf32>
    %c0_59 = arith.constant 0 : index
    %c5_60 = arith.constant 5 : index
    %c0_61 = arith.constant 0 : index
    %c0_62 = arith.constant 0 : index
    %86 = vector.load %arg3[%c0_59, %c5_60, %c0_61, %c0_62] : memref<1x8x8x256xf32, #tpu.memory_space<vmem>>, vector<1x1x8x256xf32>
    %87 = vector.shape_cast %86 : vector<1x1x8x256xf32> to vector<8x256xf32>
    %88 = arith.subf %87, %15 : vector<8x256xf32>
    %89 = vector.broadcast %0 : f32 to vector<8x256xf32>
    %90 = arith.mulf %89, %88 : vector<8x256xf32>
    %91 = vector.broadcast %2 : f32 to vector<8x256xf32>
    %92 = arith.mulf %91, %79 : vector<8x256xf32>
    %93 = arith.addf %90, %92 : vector<8x256xf32>
    %94 = arith.subf %87, %93 : vector<8x256xf32>
    %95 = vector.broadcast %1 : f32 to vector<8x256xf32>
    %96 = arith.mulf %95, %94 : vector<8x256xf32>
    %97 = vector.broadcast %3 : f32 to vector<8x256xf32>
    %98 = arith.mulf %97, %15 : vector<8x256xf32>
    %99 = arith.addf %96, %98 : vector<8x256xf32>
    %c0_63 = arith.constant 0 : index
    %c6_64 = arith.constant 6 : index
    %c0_65 = arith.constant 0 : index
    %c0_66 = arith.constant 0 : index
    %100 = vector.load %arg3[%c0_63, %c6_64, %c0_65, %c0_66] : memref<1x8x8x256xf32, #tpu.memory_space<vmem>>, vector<1x1x8x256xf32>
    %101 = vector.shape_cast %100 : vector<1x1x8x256xf32> to vector<8x256xf32>
    %102 = arith.subf %101, %17 : vector<8x256xf32>
    %103 = vector.broadcast %0 : f32 to vector<8x256xf32>
    %104 = arith.mulf %103, %102 : vector<8x256xf32>
    %105 = vector.broadcast %2 : f32 to vector<8x256xf32>
    %106 = arith.mulf %105, %93 : vector<8x256xf32>
    %107 = arith.addf %104, %106 : vector<8x256xf32>
    %108 = arith.subf %101, %107 : vector<8x256xf32>
    %109 = vector.broadcast %1 : f32 to vector<8x256xf32>
    %110 = arith.mulf %109, %108 : vector<8x256xf32>
    %111 = vector.broadcast %3 : f32 to vector<8x256xf32>
    %112 = arith.mulf %111, %17 : vector<8x256xf32>
    %113 = arith.addf %110, %112 : vector<8x256xf32>
    %c0_67 = arith.constant 0 : index
    %c7_68 = arith.constant 7 : index
    %c0_69 = arith.constant 0 : index
    %c0_70 = arith.constant 0 : index
    %114 = vector.load %arg3[%c0_67, %c7_68, %c0_69, %c0_70] : memref<1x8x8x256xf32, #tpu.memory_space<vmem>>, vector<1x1x8x256xf32>
    %115 = vector.shape_cast %114 : vector<1x1x8x256xf32> to vector<8x256xf32>
    %116 = arith.subf %115, %19 : vector<8x256xf32>
    %117 = vector.broadcast %0 : f32 to vector<8x256xf32>
    %118 = arith.mulf %117, %116 : vector<8x256xf32>
    %119 = vector.broadcast %2 : f32 to vector<8x256xf32>
    %120 = arith.mulf %119, %107 : vector<8x256xf32>
    %121 = arith.addf %118, %120 : vector<8x256xf32>
    %122 = arith.subf %115, %121 : vector<8x256xf32>
    %123 = vector.broadcast %1 : f32 to vector<8x256xf32>
    %124 = arith.mulf %123, %122 : vector<8x256xf32>
    %125 = vector.broadcast %3 : f32 to vector<8x256xf32>
    %126 = arith.mulf %125, %19 : vector<8x256xf32>
    %127 = arith.addf %124, %126 : vector<8x256xf32>
    %128 = arith.addf %121, %21 : vector<8x256xf32>
    %c0_71 = arith.constant 0 : index
    %c0_72 = arith.constant 0 : index
    %c0_73 = arith.constant 0 : index
    %c0_74 = arith.constant 0 : index
    %129 = vector.load %arg4[%c0_71, %c0_72, %c0_73, %c0_74] : memref<1x12x8x256xf32, #tpu.memory_space<vmem>>, vector<1x1x8x256xf32>
    %130 = vector.shape_cast %129 : vector<1x1x8x256xf32> to vector<8x256xf32>
    %131 = vector.shape_cast %128 : vector<8x256xf32> to vector<1x1x8x256xf32>
    tpu.vector_store %arg4[%c0_71, %c0_72, %c0_73, %c0_74], %131 {strides = array<i32>} : memref<1x12x8x256xf32, #tpu.memory_space<vmem>>, vector<1x1x8x256xf32>,
    %132 = arith.addf %121, %23 : vector<8x256xf32>
    %c0_75 = arith.constant 0 : index
    %c1_76 = arith.constant 1 : index
    %c0_77 = arith.constant 0 : index
    %c0_78 = arith.constant 0 : index
    %133 = vector.load %arg4[%c0_75, %c1_76, %c0_77, %c0_78] : memref<1x12x8x256xf32, #tpu.memory_space<vmem>>, vector<1x1x8x256xf32>
    %134 = vector.shape_cast %133 : vector<1x1x8x256xf32> to vector<8x256xf32>
    %135 = vector.shape_cast %132 : vector<8x256xf32> to vector<1x1x8x256xf32>
    tpu.vector_store %arg4[%c0_75, %c1_76, %c0_77, %c0_78], %135 {strides = array<i32>} : memref<1x12x8x256xf32, #tpu.memory_space<vmem>>, vector<1x1x8x256xf32>,
    %136 = arith.addf %121, %25 : vector<8x256xf32>
    %c0_79 = arith.constant 0 : index
    %c2_80 = arith.constant 2 : index
    %c0_81 = arith.constant 0 : index
    %c0_82 = arith.constant 0 : index
    %137 = vector.load %arg4[%c0_79, %c2_80, %c0_81, %c0_82] : memref<1x12x8x256xf32, #tpu.memory_space<vmem>>, vector<1x1x8x256xf32>
    %138 = vector.shape_cast %137 : vector<1x1x8x256xf32> to vector<8x256xf32>
    %139 = vector.shape_cast %136 : vector<8x256xf32> to vector<1x1x8x256xf32>
    tpu.vector_store %arg4[%c0_79, %c2_80, %c0_81, %c0_82], %139 {strides = array<i32>} : memref<1x12x8x256xf32, #tpu.memory_space<vmem>>, vector<1x1x8x256xf32>,
    %140 = arith.addf %121, %27 : vector<8x256xf32>
    %c0_83 = arith.constant 0 : index
    %c3_84 = arith.constant 3 : index
    %c0_85 = arith.constant 0 : index
    %c0_86 = arith.constant 0 : index
    %141 = vector.load %arg4[%c0_83, %c3_84, %c0_85, %c0_86] : memref<1x12x8x256xf32, #tpu.memory_space<vmem>>, vector<1x1x8x256xf32>
    %142 = vector.shape_cast %141 : vector<1x1x8x256xf32> to vector<8x256xf32>
    %143 = vector.shape_cast %140 : vector<8x256xf32> to vector<1x1x8x256xf32>
    tpu.vector_store %arg4[%c0_83, %c3_84, %c0_85, %c0_86], %143 {strides = array<i32>} : memref<1x12x8x256xf32, #tpu.memory_space<vmem>>, vector<1x1x8x256xf32>,
    %144 = arith.addf %121, %5 : vector<8x256xf32>
    %c0_87 = arith.constant 0 : index
    %c4_88 = arith.constant 4 : index
    %c0_89 = arith.constant 0 : index
    %c0_90 = arith.constant 0 : index
    %145 = vector.load %arg4[%c0_87, %c4_88, %c0_89, %c0_90] : memref<1x12x8x256xf32, #tpu.memory_space<vmem>>, vector<1x1x8x256xf32>
    %146 = vector.shape_cast %145 : vector<1x1x8x256xf32> to vector<8x256xf32>
    %147 = vector.shape_cast %144 : vector<8x256xf32> to vector<1x1x8x256xf32>
    tpu.vector_store %arg4[%c0_87, %c4_88, %c0_89, %c0_90], %147 {strides = array<i32>} : memref<1x12x8x256xf32, #tpu.memory_space<vmem>>, vector<1x1x8x256xf32>,
    %148 = arith.addf %121, %43 : vector<8x256xf32>
    %c0_91 = arith.constant 0 : index
    %c5_92 = arith.constant 5 : index
    %c0_93 = arith.constant 0 : index
    %c0_94 = arith.constant 0 : index
    %149 = vector.load %arg4[%c0_91, %c5_92, %c0_93, %c0_94] : memref<1x12x8x256xf32, #tpu.memory_space<vmem>>, vector<1x1x8x256xf32>
    %150 = vector.shape_cast %149 : vector<1x1x8x256xf32> to vector<8x256xf32>
    %151 = vector.shape_cast %148 : vector<8x256xf32> to vector<1x1x8x256xf32>
    tpu.vector_store %arg4[%c0_91, %c5_92, %c0_93, %c0_94], %151 {strides = array<i32>} : memref<1x12x8x256xf32, #tpu.memory_space<vmem>>, vector<1x1x8x256xf32>,
    %152 = arith.addf %121, %57 : vector<8x256xf32>
    %c0_95 = arith.constant 0 : index
    %c6_96 = arith.constant 6 : index
    %c0_97 = arith.constant 0 : index
    %c0_98 = arith.constant 0 : index
    %153 = vector.load %arg4[%c0_95, %c6_96, %c0_97, %c0_98] : memref<1x12x8x256xf32, #tpu.memory_space<vmem>>, vector<1x1x8x256xf32>
    %154 = vector.shape_cast %153 : vector<1x1x8x256xf32> to vector<8x256xf32>
    %155 = vector.shape_cast %152 : vector<8x256xf32> to vector<1x1x8x256xf32>
    tpu.vector_store %arg4[%c0_95, %c6_96, %c0_97, %c0_98], %155 {strides = array<i32>} : memref<1x12x8x256xf32, #tpu.memory_space<vmem>>, vector<1x1x8x256xf32>,
    %156 = arith.addf %121, %71 : vector<8x256xf32>
    %c0_99 = arith.constant 0 : index
    %c7_100 = arith.constant 7 : index
    %c0_101 = arith.constant 0 : index
    %c0_102 = arith.constant 0 : index
    %157 = vector.load %arg4[%c0_99, %c7_100, %c0_101, %c0_102] : memref<1x12x8x256xf32, #tpu.memory_space<vmem>>, vector<1x1x8x256xf32>
    %158 = vector.shape_cast %157 : vector<1x1x8x256xf32> to vector<8x256xf32>
    %159 = vector.shape_cast %156 : vector<8x256xf32> to vector<1x1x8x256xf32>
    tpu.vector_store %arg4[%c0_99, %c7_100, %c0_101, %c0_102], %159 {strides = array<i32>} : memref<1x12x8x256xf32, #tpu.memory_space<vmem>>, vector<1x1x8x256xf32>,
    %160 = arith.addf %121, %85 : vector<8x256xf32>
    %c0_103 = arith.constant 0 : index
    %c8_104 = arith.constant 8 : index
    %c0_105 = arith.constant 0 : index
    %c0_106 = arith.constant 0 : index
    %161 = vector.load %arg4[%c0_103, %c8_104, %c0_105, %c0_106] : memref<1x12x8x256xf32, #tpu.memory_space<vmem>>, vector<1x1x8x256xf32>
    %162 = vector.shape_cast %161 : vector<1x1x8x256xf32> to vector<8x256xf32>
    %163 = vector.shape_cast %160 : vector<8x256xf32> to vector<1x1x8x256xf32>
    tpu.vector_store %arg4[%c0_103, %c8_104, %c0_105, %c0_106], %163 {strides = array<i32>} : memref<1x12x8x256xf32, #tpu.memory_space<vmem>>, vector<1x1x8x256xf32>,
    %164 = arith.addf %121, %99 : vector<8x256xf32>
    %c0_107 = arith.constant 0 : index
    %c9_108 = arith.constant 9 : index
    %c0_109 = arith.constant 0 : index
    %c0_110 = arith.constant 0 : index
    %165 = vector.load %arg4[%c0_107, %c9_108, %c0_109, %c0_110] : memref<1x12x8x256xf32, #tpu.memory_space<vmem>>, vector<1x1x8x256xf32>
    %166 = vector.shape_cast %165 : vector<1x1x8x256xf32> to vector<8x256xf32>
    %167 = vector.shape_cast %164 : vector<8x256xf32> to vector<1x1x8x256xf32>
    tpu.vector_store %arg4[%c0_107, %c9_108, %c0_109, %c0_110], %167 {strides = array<i32>} : memref<1x12x8x256xf32, #tpu.memory_space<vmem>>, vector<1x1x8x256xf32>,
    %168 = arith.addf %121, %113 : vector<8x256xf32>
    %c0_111 = arith.constant 0 : index
    %c10_112 = arith.constant 10 : index
    %c0_113 = arith.constant 0 : index
    %c0_114 = arith.constant 0 : index
    %169 = vector.load %arg4[%c0_111, %c10_112, %c0_113, %c0_114] : memref<1x12x8x256xf32, #tpu.memory_space<vmem>>, vector<1x1x8x256xf32>
    %170 = vector.shape_cast %169 : vector<1x1x8x256xf32> to vector<8x256xf32>
    %171 = vector.shape_cast %168 : vector<8x256xf32> to vector<1x1x8x256xf32>
    tpu.vector_store %arg4[%c0_111, %c10_112, %c0_113, %c0_114], %171 {strides = array<i32>} : memref<1x12x8x256xf32, #tpu.memory_space<vmem>>, vector<1x1x8x256xf32>,
    %172 = arith.addf %121, %127 : vector<8x256xf32>
    %c0_115 = arith.constant 0 : index
    %c11_116 = arith.constant 11 : index
    %c0_117 = arith.constant 0 : index
    %c0_118 = arith.constant 0 : index
    %173 = vector.load %arg4[%c0_115, %c11_116, %c0_117, %c0_118] : memref<1x12x8x256xf32, #tpu.memory_space<vmem>>, vector<1x1x8x256xf32>
    %174 = vector.shape_cast %173 : vector<1x1x8x256xf32> to vector<8x256xf32>
    %175 = vector.shape_cast %172 : vector<8x256xf32> to vector<1x1x8x256xf32>
    tpu.vector_store %arg4[%c0_115, %c11_116, %c0_117, %c0_118], %175 {strides = array<i32>} : memref<1x12x8x256xf32, #tpu.memory_space<vmem>>, vector<1x1x8x256xf32>,
    return
  }
  func.func @transform_0(%arg0: i32) -> i32 {
    %c0_i32 = arith.constant 0 : i32
    %c0_i32_0 = arith.constant 0 : i32
    return %c0_i32 : i32
  }
  func.func @transform_1(%arg0: i32) -> (i32, i32, i32, i32) {
    %c0_i32 = arith.constant 0 : i32
    %c0_i32_0 = arith.constant 0 : i32
    %c0_i32_1 = arith.constant 0 : i32
    %c0_i32_2 = arith.constant 0 : i32
    return %arg0, %c0_i32, %c0_i32_0, %c0_i32_1 : i32, i32, i32, i32
  }
  func.func @transform_2(%arg0: i32) -> (i32, i32, i32, i32) {
    %c0_i32 = arith.constant 0 : i32
    %c0_i32_0 = arith.constant 0 : i32
    %c0_i32_1 = arith.constant 0 : i32
    %c0_i32_2 = arith.constant 0 : i32
    return %arg0, %c0_i32, %c0_i32_0, %c0_i32_1 : i32, i32, i32, i32
  }
  func.func @transform_3(%arg0: i32) -> (i32, i32, i32, i32) {
    %c0_i32 = arith.constant 0 : i32
    %c0_i32_0 = arith.constant 0 : i32
    %c0_i32_1 = arith.constant 0 : i32
    %c0_i32_2 = arith.constant 0 : i32
    return %arg0, %c0_i32, %c0_i32_0, %c0_i32_1 : i32, i32, i32, i32
  }
}

</mosaic_0001>

<llo_original>
// kernel: tpu_custom_call.1
$region0: #{tpu_custom_call.1}
  #allocation0 [shape = 'u32[]', space=smem, size = 0x4, offset = 0x4, fixed_abs, tag = 'smem constant byte address 0x4 - core index']
  #allocation1 [shape = 'u32[72,128]{1,0:T(1,128)}', space=vmem, size = 0x9000, scoped, tag = 'internal scratch']
  %s0 = inlined_call_operand.hbm [shape: f32[2], index: 0, kind: input, shape index: {}]
  %s1 = inlined_call_operand.hbm [shape: f32[1,12,8,256], index: 1, kind: input, shape index: {}]
  %s2 = inlined_call_operand.hbm [shape: f32[1,8,8,256], index: 2, kind: input, shape index: {}]
  %s3 = inlined_call_operand.hbm [shape: f32[1,12,8,256], index: 3, kind: output, shape index: {}]
  %s4 = sld [smem:[#allocation0]]
  $region34: #{tpu_custom_call.1} parent=0
    _
  %s6 = ssub.s32 1, %s4
  %s7 = scalar_select 0, %s6, %s4
  $region1: #{tpu_custom_call.1} parent=0
    #allocation2 [shape = 'u8[512]{0}', space=smem, size = 0x200, scoped, tag = 'input window, operand 0, single buffered']
    #allocation3 [shape = 's32[1]{0}', space=sflag, size = 0x4, scoped, tag = 'scoped memory for tpu_custom_call.1']
    #allocation4 [shape = 's32[1]{0}', space=sflag, size = 0x4, scoped, tag = 'scoped memory for tpu_custom_call.1']
    #allocation5 [shape = 's32[1]{0}', space=sflag, size = 0x4, scoped, tag = 'scoped memory for tpu_custom_call.1']
    #allocation6 [shape = 'u8[98304]{0}', space=vmem, size = 0x18000, scoped, tag = 'input window, operand 1, single buffered']
    #allocation7 [shape = 'u8[65536]{0}', space=vmem, size = 0x10000, scoped, tag = 'input window, operand 2, single buffered']
    #allocation8 [shape = 's32[1]{0}', space=sflag, size = 0x4, scoped, tag = 'scoped memory for tpu_custom_call.1']
    #allocation9 [shape = 'u8[98304]{0}', space=vmem, size = 0x18000, scoped, tag = 'output window, operand 0, single buffered']
    %8 = vsyncpa [#allocation5], 0
    %9 = vsyncpa [#allocation3], 0
    %10 = vsyncpa [#allocation8], 0
    %11 = vsyncpa [#allocation4], 0
    // Predicated region
    $region2: #{tpu_custom_call.1} parent=1 // pred_check
      _
    $region3: #{tpu_custom_call.1} parent=1 // pred_check_branch
      %13 = sbr.rel (0) target = $region5
    $region4: #{tpu_custom_call.1} parent=1 // pred_region
      %15 = vsyncadd [#allocation5], 0
      %s17 = sshll.u32 %s0, 4
      %s18 = int_to_ptr.hbm [resolvable:$true] %s17
      %20 = dma.hbm_to_smem %s18, 16, [#allocation2], [#allocation5]
    $region5: #{tpu_custom_call.1} parent=1 // pred_fallthru
      _
    // Predicated region
    $region6: #{tpu_custom_call.1} parent=1 // pred_check
      _
    $region7: #{tpu_custom_call.1} parent=1 // pred_check_branch
      %22 = sbr.rel (0) target = $region9
    $region8: #{tpu_custom_call.1} parent=1 // pred_region
      %24 = vsyncadd [#allocation3], 0
      %s25 = sshll.u32 %s1, 4
      %s26 = int_to_ptr.hbm [resolvable:$true] %s25
      %s27 = sshll.u32 [#allocation6], 4
      %s28 = int_to_ptr.vmem [resolvable:$true] %s27
      %33 = dma.hbm_to_vmem [thread:$0]  %s26, 3072, %s28, [#allocation3], 256, 256, 16
    $region9: #{tpu_custom_call.1} parent=1 // pred_fallthru
      _
    // Predicated region
    $region10: #{tpu_custom_call.1} parent=1 // pred_check
      _
    $region11: #{tpu_custom_call.1} parent=1 // pred_check_branch
      %35 = sbr.rel (0) target = $region13
    $region12: #{tpu_custom_call.1} parent=1 // pred_region
      %37 = vsyncadd [#allocation8], 0
      %s38 = sshll.u32 %s2, 4
      %s39 = int_to_ptr.hbm [resolvable:$true] %s38
      %s40 = sshll.u32 [#allocation7], 4
      %s41 = int_to_ptr.vmem [resolvable:$true] %s40
      %46 = dma.hbm_to_vmem [thread:$0]  %s39, 2048, %s41, [#allocation8], 256, 256, 16
    $region13: #{tpu_custom_call.1} parent=1 // pred_fallthru
      _
    // Predicated region
    $region14: #{tpu_custom_call.1} parent=1 // pred_check
      _
    $region15: #{tpu_custom_call.1} parent=1 // pred_check_branch
      %48 = sbr.rel (0) target = $region17
    $region16: #{tpu_custom_call.1} parent=1 // pred_region
      %50 = dma.done [#allocation5], 16
    $region17: #{tpu_custom_call.1} parent=1 // pred_fallthru
      _
    // Predicated region
    $region18: #{tpu_custom_call.1} parent=1 // pred_check
      _
    $region19: #{tpu_custom_call.1} parent=1 // pred_check_branch
      %52 = sbr.rel (0) target = $region21
    $region20: #{tpu_custom_call.1} parent=1 // pred_region
      %54 = dma.done [#allocation3], 3072
    $region21: #{tpu_custom_call.1} parent=1 // pred_fallthru
      _
    // Predicated region
    $region22: #{tpu_custom_call.1} parent=1 // pred_check
      _
    $region23: #{tpu_custom_call.1} parent=1 // pred_check_branch
      %56 = sbr.rel (0) target = $region25
    $region24: #{tpu_custom_call.1} parent=1 // pred_region
      %58 = dma.done [#allocation8], 2048
    $region25: #{tpu_custom_call.1} parent=1 // pred_fallthru
      _
    %59 = sfence
    %s60 = sld [smem:[#allocation2]]
    %s61 = sld [smem:[#allocation2 + $0x1]]
    %s62 = ssub.f32 1.0, %s60
    %s63 = ssub.f32 1.0, %s61
    %v64 = vld [vmem:[#allocation6] sm:$0xff]
    %v65 = vld [vmem:[#allocation6 + $0x8] sm:$0xff]
    %s66 = scalar_lea.vmem [#allocation6], 16
    %v67 = vld [vmem:[%s66] sm:$0xff]
    %v68 = vld [vmem:[%s66 + $0x8] sm:$0xff]
    %s69 = scalar_lea.vmem [#allocation6], 32
    %v70 = vld [vmem:[%s69] sm:$0xff]
    %v71 = vld [vmem:[%s69 + $0x8] sm:$0xff]
    %s72 = scalar_lea.vmem [#allocation6], 48
    %v73 = vld [vmem:[%s72] sm:$0xff]
    %v74 = vld [vmem:[%s72 + $0x8] sm:$0xff]
    %s75 = scalar_lea.vmem [#allocation6], 64
    %v76 = vld [vmem:[%s75] sm:$0xff]
    %v77 = vld [vmem:[%s75 + $0x8] sm:$0xff]
    %s78 = scalar_lea.vmem [#allocation6], 80
    %v79 = vld [vmem:[%s78] sm:$0xff]
    %v80 = vld [vmem:[%s78 + $0x8] sm:$0xff]
    %s81 = scalar_lea.vmem [#allocation6], 96
    %v82 = vld [vmem:[%s81] sm:$0xff]
    %v83 = vld [vmem:[%s81 + $0x8] sm:$0xff]
    %s84 = scalar_lea.vmem [#allocation6], 112
    %v85 = vld [vmem:[%s84] sm:$0xff]
    %v86 = vld [vmem:[%s84 + $0x8] sm:$0xff]
    %s87 = scalar_lea.vmem [#allocation6], 128
    %v88 = vld [vmem:[%s87] sm:$0xff]
    %v89 = vld [vmem:[%s87 + $0x8] sm:$0xff]
    %s90 = scalar_lea.vmem [#allocation6], 144
    %v91 = vld [vmem:[%s90] sm:$0xff]
    %v92 = vld [vmem:[%s90 + $0x8] sm:$0xff]
    %s93 = scalar_lea.vmem [#allocation6], 160
    %v94 = vld [vmem:[%s93] sm:$0xff]
    %v95 = vld [vmem:[%s93 + $0x8] sm:$0xff]
    %s96 = scalar_lea.vmem [#allocation6], 176
    %v97 = vld [vmem:[%s96] sm:$0xff]
    %v98 = vld [vmem:[%s96 + $0x8] sm:$0xff]
    %v99 = vld [vmem:[#allocation7] sm:$0xff]
    %v100 = vld [vmem:[#allocation7 + $0x8] sm:$0xff]
    %s101 = scalar_lea.vmem [#allocation7], 16
    %v102 = vld [vmem:[%s101] sm:$0xff]
    %v103 = vld [vmem:[%s101 + $0x8] sm:$0xff]
    %v104 = vsub.f32 %v102, %v67
    %v105 = vsub.f32 %v103, %v68
    %v106 = vstv %s60
    %v107 = vmul.f32 %v106, %v104
    %v108 = vmul.f32 %v106, %v105
    %v109 = vstv %s62
    %v110 = vmul.f32 %v109, %v99
    %v111 = vmul.f32 %v109, %v100
    %v112 = vadd.f32 %v107, %v110
    %v113 = vadd.f32 %v108, %v111
    %v114 = vsub.f32 %v102, %v112
    %v115 = vsub.f32 %v103, %v113
    %v116 = vstv %s61
    %v117 = vmul.f32 %v116, %v114
    %v118 = vmul.f32 %v116, %v115
    %v119 = vstv %s63
    %v120 = vmul.f32 %v119, %v67
    %v121 = vmul.f32 %v119, %v68
    %v122 = vadd.f32 %v117, %v120
    %v123 = vadd.f32 %v118, %v121
    %s124 = scalar_lea.vmem [#allocation7], 32
    %v125 = vld [vmem:[%s124] sm:$0xff]
    %v126 = vld [vmem:[%s124 + $0x8] sm:$0xff]
    %v127 = vsub.f32 %v125, %v70
    %v128 = vsub.f32 %v126, %v71
    %v129 = vmul.f32 %v106, %v127
    %v130 = vmul.f32 %v106, %v128
    %v131 = vmul.f32 %v109, %v112
    %v132 = vmul.f32 %v109, %v113
    %v133 = vadd.f32 %v129, %v131
    %v134 = vadd.f32 %v130, %v132
    %v135 = vsub.f32 %v125, %v133
    %v136 = vsub.f32 %v126, %v134
    %v137 = vmul.f32 %v116, %v135
    %v138 = vmul.f32 %v116, %v136
    %v139 = vmul.f32 %v119, %v70
    %v140 = vmul.f32 %v119, %v71
    %v141 = vadd.f32 %v137, %v139
    %v142 = vadd.f32 %v138, %v140
    %s143 = scalar_lea.vmem [#allocation7], 48
    %v144 = vld [vmem:[%s143] sm:$0xff]
    %v145 = vld [vmem:[%s143 + $0x8] sm:$0xff]
    %v146 = vsub.f32 %v144, %v73
    %v147 = vsub.f32 %v145, %v74
    %v148 = vmul.f32 %v106, %v146
    %v149 = vmul.f32 %v106, %v147
    %v150 = vmul.f32 %v109, %v133
    %v151 = vmul.f32 %v109, %v134
    %v152 = vadd.f32 %v148, %v150
    %v153 = vadd.f32 %v149, %v151
    %v154 = vsub.f32 %v144, %v152
    %v155 = vsub.f32 %v145, %v153
    %v156 = vmul.f32 %v116, %v154
    %v157 = vmul.f32 %v116, %v155
    %v158 = vmul.f32 %v119, %v73
    %v159 = vmul.f32 %v119, %v74
    %v160 = vadd.f32 %v156, %v158
    %v161 = vadd.f32 %v157, %v159
    %s162 = scalar_lea.vmem [#allocation7], 64
    %v163 = vld [vmem:[%s162] sm:$0xff]
    %v164 = vld [vmem:[%s162 + $0x8] sm:$0xff]
    %v165 = vsub.f32 %v163, %v76
    %v166 = vsub.f32 %v164, %v77
    %v167 = vmul.f32 %v106, %v165
    %v168 = vmul.f32 %v106, %v166
    %v169 = vmul.f32 %v109, %v152
    %v170 = vmul.f32 %v109, %v153
    %v171 = vadd.f32 %v167, %v169
    %v172 = vadd.f32 %v168, %v170
    %v173 = vsub.f32 %v163, %v171
    %v174 = vsub.f32 %v164, %v172
    %v175 = vmul.f32 %v116, %v173
    %v176 = vmul.f32 %v116, %v174
    %v177 = vmul.f32 %v119, %v76
    %v178 = vmul.f32 %v119, %v77
    %v179 = vadd.f32 %v175, %v177
    %v180 = vadd.f32 %v176, %v178
    %s181 = scalar_lea.vmem [#allocation7], 80
    %v182 = vld [vmem:[%s181] sm:$0xff]
    %v183 = vld [vmem:[%s181 + $0x8] sm:$0xff]
    %v184 = vsub.f32 %v182, %v79
    %v185 = vsub.f32 %v183, %v80
    %v186 = vmul.f32 %v106, %v184
    %v187 = vmul.f32 %v106, %v185
    %v188 = vmul.f32 %v109, %v171
    %v189 = vmul.f32 %v109, %v172
    %v190 = vadd.f32 %v186, %v188
    %v191 = vadd.f32 %v187, %v189
    %v192 = vsub.f32 %v182, %v190
    %v193 = vsub.f32 %v183, %v191
    %v194 = vmul.f32 %v116, %v192
    %v195 = vmul.f32 %v116, %v193
    %v196 = vmul.f32 %v119, %v79
    %v197 = vmul.f32 %v119, %v80
    %v198 = vadd.f32 %v194, %v196
    %v199 = vadd.f32 %v195, %v197
    %s200 = scalar_lea.vmem [#allocation7], 96
    %v201 = vld [vmem:[%s200] sm:$0xff]
    %v202 = vld [vmem:[%s200 + $0x8] sm:$0xff]
    %v203 = vsub.f32 %v201, %v82
    %v204 = vsub.f32 %v202, %v83
    %v205 = vmul.f32 %v106, %v203
    %v206 = vmul.f32 %v106, %v204
    %v207 = vmul.f32 %v109, %v190
    %v208 = vmul.f32 %v109, %v191
    %v209 = vadd.f32 %v205, %v207
    %v210 = vadd.f32 %v206, %v208
    %v211 = vsub.f32 %v201, %v209
    %v212 = vsub.f32 %v202, %v210
    %v213 = vmul.f32 %v116, %v211
    %v214 = vmul.f32 %v116, %v212
    %v215 = vmul.f32 %v119, %v82
    %v216 = vmul.f32 %v119, %v83
    %v217 = vadd.f32 %v213, %v215
    %v218 = vadd.f32 %v214, %v216
    %s219 = scalar_lea.vmem [#allocation7], 112
    %v220 = vld [vmem:[%s219] sm:$0xff]
    %v221 = vld [vmem:[%s219 + $0x8] sm:$0xff]
    %v222 = vsub.f32 %v220, %v85
    %v223 = vsub.f32 %v221, %v86
    %v224 = vmul.f32 %v106, %v222
    %v225 = vmul.f32 %v106, %v223
    %v226 = vmul.f32 %v109, %v209
    %v227 = vmul.f32 %v109, %v210
    %v228 = vadd.f32 %v224, %v226
    %v229 = vadd.f32 %v225, %v227
    %v230 = vsub.f32 %v220, %v228
    %v231 = vsub.f32 %v221, %v229
    %v232 = vmul.f32 %v116, %v230
    %v233 = vmul.f32 %v116, %v231
    %v234 = vmul.f32 %v119, %v85
    %v235 = vmul.f32 %v119, %v86
    %v236 = vadd.f32 %v232, %v234
    %v237 = vadd.f32 %v233, %v235
    %v238 = vadd.f32 %v228, %v88
    %v239 = vadd.f32 %v229, %v89
    %240 = vst [vmem:[#allocation9] sm:$0xff] %v238
    %241 = vst [vmem:[#allocation9 + $0x8] sm:$0xff] %v239
    %v242 = vadd.f32 %v228, %v91
    %v243 = vadd.f32 %v229, %v92
    %s244 = scalar_lea.vmem [#allocation9], 16
    %245 = vst [vmem:[%s244] sm:$0xff] %v242
    %246 = vst [vmem:[%s244 + $0x8] sm:$0xff] %v243
    %v247 = vadd.f32 %v228, %v94
    %v248 = vadd.f32 %v229, %v95
    %s249 = scalar_lea.vmem [#allocation9], 32
    %250 = vst [vmem:[%s249] sm:$0xff] %v247
    %251 = vst [vmem:[%s249 + $0x8] sm:$0xff] %v248
    %v252 = vadd.f32 %v228, %v97
    %v253 = vadd.f32 %v229, %v98
    %s254 = scalar_lea.vmem [#allocation9], 48
    %255 = vst [vmem:[%s254] sm:$0xff] %v252
    %256 = vst [vmem:[%s254 + $0x8] sm:$0xff] %v253
    %v257 = vadd.f32 %v228, %v64
    %v258 = vadd.f32 %v229, %v65
    %s259 = scalar_lea.vmem [#allocation9], 64
    %260 = vst [vmem:[%s259] sm:$0xff] %v257
    %261 = vst [vmem:[%s259 + $0x8] sm:$0xff] %v258
    %v262 = vadd.f32 %v228, %v122
    %v263 = vadd.f32 %v229, %v123
    %s264 = scalar_lea.vmem [#allocation9], 80
    %265 = vst [vmem:[%s264] sm:$0xff] %v262
    %266 = vst [vmem:[%s264 + $0x8] sm:$0xff] %v263
    %v267 = vadd.f32 %v228, %v141
    %v268 = vadd.f32 %v229, %v142
    %s269 = scalar_lea.vmem [#allocation9], 96
    %270 = vst [vmem:[%s269] sm:$0xff] %v267
    %271 = vst [vmem:[%s269 + $0x8] sm:$0xff] %v268
    %v272 = vadd.f32 %v228, %v160
    %v273 = vadd.f32 %v229, %v161
    %s274 = scalar_lea.vmem [#allocation9], 112
    %275 = vst [vmem:[%s274] sm:$0xff] %v272
    %276 = vst [vmem:[%s274 + $0x8] sm:$0xff] %v273
    %v277 = vadd.f32 %v228, %v179
    %v278 = vadd.f32 %v229, %v180
    %s279 = scalar_lea.vmem [#allocation9], 128
    %280 = vst [vmem:[%s279] sm:$0xff] %v277
    %281 = vst [vmem:[%s279 + $0x8] sm:$0xff] %v278
    %v282 = vadd.f32 %v228, %v198
    %v283 = vadd.f32 %v229, %v199
    %s284 = scalar_lea.vmem [#allocation9], 144
    %285 = vst [vmem:[%s284] sm:$0xff] %v282
    %286 = vst [vmem:[%s284 + $0x8] sm:$0xff] %v283
    %v287 = vadd.f32 %v228, %v217
    %v288 = vadd.f32 %v229, %v218
    %s289 = scalar_lea.vmem [#allocation9], 160
    %290 = vst [vmem:[%s289] sm:$0xff] %v287
    %291 = vst [vmem:[%s289 + $0x8] sm:$0xff] %v288
    %v292 = vadd.f32 %v228, %v236
    %v293 = vadd.f32 %v229, %v237
    %s294 = scalar_lea.vmem [#allocation9], 176
    %295 = vst [vmem:[%s294] sm:$0xff] %v292
    %296 = vst [vmem:[%s294 + $0x8] sm:$0xff] %v293
    // Predicated region
    $region26: #{tpu_custom_call.1} parent=1 // pred_check
      _
    $region27: #{tpu_custom_call.1} parent=1 // pred_check_branch
      %298 = sbr.rel (0) target = $region29
    $region28: #{tpu_custom_call.1} parent=1 // pred_region
      %300 = vsyncadd [#allocation4], 0
      %s301 = sshll.u32 [#allocation9], 4
      %s302 = int_to_ptr.vmem [resolvable:$true] %s301
      %s303 = sshll.u32 %s3, 4
      %s304 = int_to_ptr.hbm [resolvable:$true] %s303
      %309 = dma.vmem_to_hbm [thread:$0]  %s302, 3072, %s304, [#allocation4], 256, 256, 16
    $region29: #{tpu_custom_call.1} parent=1 // pred_fallthru
      _
    // Predicated region
    $region30: #{tpu_custom_call.1} parent=1 // pred_check
      _
    $region31: #{tpu_custom_call.1} parent=1 // pred_check_branch
      %311 = sbr.rel (0) target = $region33
    $region32: #{tpu_custom_call.1} parent=1 // pred_region
      %313 = dma.done [#allocation4], 3072
    $region33: #{tpu_custom_call.1} parent=1 // pred_fallthru
      _
    %314 = vsyncpa [#allocation3], 1
    %315 = vsyncpa [#allocation8], 1
    %316 = vsyncpa [#allocation4], 1
    %317 = vsyncpa [#allocation5], 1

</llo_original>
